<compile_context>
chip_gen: v7x
topology: tpu7x:2x2x1
jax: 0.10.0
libtpu: 0.0.40
codegen_flags: <defaults>
</compile_context>

<pallas_src>
import functools

import jax
import jax.numpy as jnp
import numpy as np
from jax.experimental import pallas as pl
from jax.experimental.pallas import tpu as pltpu

# ---- model hyper-params (small, consistent with the module) ----
N_NODES = 32     # number of graph nodes
K_DEG   = 4      # fixed in-degree per destination node
D_IN    = 32     # input_dim
HEAD    = 2      # head
HD      = 16     # output_dim (per-head dim, self.hd)
HH      = HEAD * HD   # head * hd

TW = 128         # padded lane width of the projection table (bf16, full-lane stores)


# ---------------------------------------------------------------------------
# Kernel A: fused projection.  One matmul per node tile builds the bf16 table
#     tbl = [ hp (HH) | dd (HH) | s_src (HEAD, atten bias folded) | s_dst (HEAD) | 0-pad ]
# stored 128-lane dense.
# ---------------------------------------------------------------------------
def _proj_kernel(h_ref, wf_ref, bf_ref, tbl_ref):
    acc = (jnp.dot(h_ref[...], wf_ref[...], preferred_element_type=jnp.float32)
           + bf_ref[...])
    tbl_ref[...] = acc.astype(tbl_ref.dtype)              # full-lane bf16 store


# ---------------------------------------------------------------------------
# Kernel B: per-destination attention over K lane-dense gathered neighbor rows.
#   Online (flash-style) softmax over k, head-vectorized accumulator, single
#   lane-dense [tile, 128] f32 output slab  packed = [ edge_s | out | pad ].
# ---------------------------------------------------------------------------
def _attn_kernel(tbl_d_ref, tbl_s_ref, wae_ref, packed_ref, *, head, hd, k_deg, tw):
    f32 = jnp.float32
    hh = head * hd

    # dst side: only dd and s_dst are needed -> ref-level slices (dst hp lanes untouched)
    dd_d = tbl_d_ref[:, hh:2 * hh].astype(f32)                       # d_liner(dst)
    s_dst = tbl_d_ref[:, 2 * hh + head:2 * hh + 2 * head].astype(f32)  # per-head dst term
    wae = wae_ref[...]                                               # [HH, head] block-diag wa_e

    t_rows = dd_d.shape[0]

    # 0/1 head-expansion matrix: E[h, j] = 1 iff lane j belongs to head h ([T,head]@E -> [T,hh])
    lane_head = jax.lax.broadcasted_iota(jnp.int32, (head, hh), 1) // hd
    head_id = jax.lax.broadcasted_iota(jnp.int32, (head, hh), 0)
    expand = (lane_head == head_id).astype(f32)                      # [head, hh]

    m = jnp.full((t_rows, head), -1e30, dtype=f32)                   # running max (per head)
    l = jnp.zeros((t_rows, head), dtype=f32)                         # running exp-sum
    acc = jnp.zeros((t_rows, hh), dtype=f32)                         # head-vectorized accumulator
    es_sum = jnp.zeros((t_rows, hh), dtype=f32)

    # K is small & static -> unrolled loop; only O(1) tiles stay live (online softmax).
    for k in range(k_deg):
        base = k * tw                                                # 128-lane aligned slot
        hp_s = tbl_s_ref[:, base:base + hh].astype(f32)              # w_liner(src)
        dd_s = tbl_s_ref[:, base + hh:base + 2 * hh].astype(f32)     # d_liner(src)
        s_src = tbl_s_ref[:, base + 2 * hh:base + 2 * hh + head].astype(f32)

        es = jnp.tanh(dd_s + dd_d)                                   # relation_aware(src, dst)
        es_sum = es_sum + es

        # logit = s_src(+ba) + s_dst + es·wa_e  (src/dst terms came from the fused matmul)
        lg = s_src + s_dst + jnp.dot(es, wae, preferred_element_type=f32)   # [T, head]
        lg = jnp.where(lg > 0, lg, 0.01 * lg)                        # LeakyReLU (slope 0.01)

        # online softmax update (head-vectorized accumulator)
        m_new = jnp.maximum(m, lg)
        corr = jnp.exp(m - m_new)
        p = jnp.exp(lg - m_new)
        l = l * corr + p
        corr_x = jnp.dot(corr, expand, preferred_element_type=f32)   # [T, hh]
        p_x = jnp.dot(p, expand, preferred_element_type=f32)         # [T, hh]
        acc = acc * corr_x + p_x * hp_s
        m = m_new

    inv_l = pl.reciprocal(l, approx=True)                            # EUP slot, effectively free
    out = acc * jnp.dot(inv_l, expand, preferred_element_type=f32)   # [T, hh]

    # single lane-dense [T, 128] store: [ edge_s | out | zero-pad ]
    pad = jnp.zeros((t_rows, tw - 2 * hh), dtype=f32)
    packed_ref[...] = jnp.concatenate(
        [es_sum * (1.0 / k_deg), out, pad], axis=-1).astype(packed_ref.dtype)


# ---------------------------------------------------------------------------
# Wrapper
# ---------------------------------------------------------------------------
def h_layer_forward(h, src_idx, params, *, tile_n=1024):
    """Returns (edge_s, out, h_proj), matching H_layer.forward with if_sum=False."""
    n, d_in = h.shape
    k_deg = src_idx.shape[1]
    head, hd = HEAD, HD
    hh = head * hd
    w_tot = 2 * hh + 2 * head
    assert w_tot <= TW

    # --- fold the attention score vectors (and atten bias) into the projection matmul ---
    Ww, bw = params["Ww"], params["bw"]
    Wd, bd = params["Wd"], params["bd"]
    wa = params["wa"][0]                                  # [3*hd]
    ba = params["ba"][0]
    wa_s, wa_d, wa_e = wa[:hd], wa[hd:2 * hd], wa[2 * hd:3 * hd]

    Ws_cols = (Ww.reshape(d_in, head, hd) * wa_s).sum(-1)          # [D_in, head]
    Wdst_cols = (Ww.reshape(d_in, head, hd) * wa_d).sum(-1)        # [D_in, head]
    bs_cols = (bw.reshape(1, head, hd) * wa_s).sum(-1) + ba        # atten bias folded here
    bd_cols = (bw.reshape(1, head, hd) * wa_d).sum(-1)

    w_pad = jnp.zeros((d_in, TW - w_tot), jnp.float32)
    b_pad = jnp.zeros((1, TW - w_tot), jnp.float32)
    w_fused = jnp.concatenate([Ww, Wd, Ws_cols, Wdst_cols, w_pad], axis=1)   # [D_in, 128]
    b_fused = jnp.concatenate([bw, bd, bs_cols, bd_cols, b_pad], axis=1)     # [1, 128]

    # block-diagonal wa_e for the edge-feature score (es @ WaE gives per-head score)
    wae = jnp.zeros((hh, head), jnp.float32)
    for t in range(head):
        wae = wae.at[t * hd:(t + 1) * hd, t].set(wa_e)

    tile = min(tile_n, n)
    # bf16 matmul inputs / bf16 table -> node tile must be a multiple of 16 (sublane packing)
    assert n % tile == 0 and tile % 16 == 0, \
        "pad N to a multiple of the node tile (tile must be a multiple of 16 for bf16)"
    grid = (n // tile,)
    cparams = pltpu.CompilerParams(dimension_semantics=("parallel",))

    # --- kernel A: fused projection table (bf16 MXU inputs, f32 accumulate, bf16 store) ---
    tbl = pl.pallas_call(
        _proj_kernel,
        out_shape=jax.ShapeDtypeStruct((n, TW), jnp.bfloat16),
        grid=grid,
        in_specs=[
            pl.BlockSpec((tile, d_in), lambda i: (i, 0)),
            pl.BlockSpec((d_in, TW), lambda i: (0, 0)),
            pl.BlockSpec((1, TW), lambda i: (0, 0)),
        ],
        out_specs=pl.BlockSpec((tile, TW), lambda i: (i, 0)),
        compiler_params=cparams,
    )(h.astype(jnp.bfloat16), w_fused.astype(jnp.bfloat16), b_fused)

    # Lane-dense per-destination gather of the *projected* bf16 table: each destination's
    # K neighbor rows are contiguous along lanes, so kernel B streams one dense block.
    # TODO(synk): at production sizes, scalar-prefetch src_idx (1-D int32 in SMEM) and
    #   gather rows from tbl (memory_space=pl.ANY) inside kernel B with batched/overlapped
    #   manual DMAs to remove this HBM round trip entirely.
    tbl_src = tbl[src_idx].reshape(n, k_deg * TW)          # [N, K*128] bf16

    # Deeper pipelining on the largest per-step DMA stream (cheap VMEM insurance).
    try:
        src_spec = pl.BlockSpec((tile, k_deg * TW), lambda i: (i, 0),
                                pipeline_mode=pl.Buffered(3))
    except TypeError:  # older BlockSpec without pipeline_mode
        src_spec = pl.BlockSpec((tile, k_deg * TW), lambda i: (i, 0))

    # --- kernel B: attention + reductions, one lane-dense [tile, 128] output slab ---
    packed = pl.pallas_call(
        functools.partial(_attn_kernel, head=head, hd=hd, k_deg=k_deg, tw=TW),
        out_shape=jax.ShapeDtypeStruct((n, TW), jnp.float32),
        grid=grid,
        in_specs=[
            pl.BlockSpec((tile, TW), lambda i: (i, 0)),
            src_spec,
            pl.BlockSpec((hh, head), lambda i: (0, 0)),
        ],
        out_specs=pl.BlockSpec((tile, TW), lambda i: (i, 0)),
        compiler_params=cparams,
    )(tbl, tbl_src, wae)

    edge_s = packed[:, :hh]
    out = packed[:, hh:2 * hh]
    hproj = tbl[:, :hh].astype(jnp.float32)                # w_liner(h), [N, head*hd]
    return edge_s, out, hproj


# ---------------------------------------------------------------------------
# Pure-JAX reference (f32 throughout), mirroring the PyTorch semantics (if_sum=False)
# ---------------------------------------------------------------------------
def h_layer_reference(h, src_idx, params):
    n = h.shape[0]
    k_deg = src_idx.shape[1]
    hp = h @ params["Ww"] + params["bw"]                     # [N, H*hd]
    d = h @ params["Wd"] + params["bd"]
    es = jnp.tanh(d[src_idx] + d[:, None, :])                # [N, K, H*hd]  relation_aware
    src_f = hp[src_idx].reshape(n, k_deg, HEAD, HD)
    dst_f = jnp.broadcast_to(hp.reshape(n, 1, HEAD, HD), (n, k_deg, HEAD, HD))
    es4 = es.reshape(n, k_deg, HEAD, HD)
    z = jnp.concatenate([src_f, dst_f, es4], axis=-1)        # [N, K, H, 3*hd]
    alpha = jnp.einsum("nkhf,f->nkh", z, params["wa"][0]) + params["ba"][0]
    alpha = jnp.where(alpha > 0, alpha, 0.01 * alpha)        # leakyrelu
    alpha = jax.nn.softmax(alpha, axis=1)[..., None]         # softmax over K
    out = jnp.sum(alpha * src_f, axis=1).reshape(n, HEAD * HD)
    edge_s = jnp.mean(es, axis=1)
    return edge_s, out, hp


if __name__ == "__main__":
    key = jax.random.PRNGKey(0)
    k_h, k_ww, k_bw, k_wd, k_bd, k_wa, k_ba = jax.random.split(key, 7)

    # deterministic inputs
    h = jax.random.normal(k_h, (N_NODES, D_IN), dtype=jnp.float32)
    # deterministic fixed-in-degree graph
    src_idx = (np.arange(N_NODES)[:, None] * 3 + np.arange(K_DEG)[None, :] * 5 + 1) % N_NODES
    src_idx = jnp.asarray(src_idx, dtype=jnp.int32)

    # deterministic parameters (shapes implied by the module __init__)
    params = {
        "Ww": 0.1 * jax.random.normal(k_ww, (D_IN, HH), dtype=jnp.float32),   # w_liner.weight.T
        "bw": 0.1 * jax.random.normal(k_bw, (1, HH), dtype=jnp.float32),      # w_liner.bias
        "Wd": 0.1 * jax.random.normal(k_wd, (D_IN, HH), dtype=jnp.float32),   # relation_aware linear
        "bd": 0.1 * jax.random.normal(k_bd, (1, HH), dtype=jnp.float32),
        "wa": 0.1 * jax.random.normal(k_wa, (1, 3 * HD), dtype=jnp.float32),  # atten.weight (Linear(3*hd,1))
        "ba": 0.1 * jax.random.normal(k_ba, (1,), dtype=jnp.float32),         # atten.bias
    }

    # tile_n=16 -> 2-step node grid even at the toy size (exercises the pipelined path);
    # at production sizes leave the default tile_n=1024 (pad N to a multiple of 16).
    outs = h_layer_forward(h, src_idx, params, tile_n=16)
    outs = jax.block_until_ready(outs)

    refs = h_layer_reference(h, src_idx, params)
    # Tolerance relaxed vs the f32 reference because matmul inputs and the projection
    # table are bf16 (f32 accumulate) and the softmax denominator uses the approx EUP
    # reciprocal, per the perf review.
    for o, r in zip(outs, refs):
        np.testing.assert_allclose(np.asarray(o), np.asarray(r), rtol=2e-2, atol=2e-2)

    print("KERNEL_OK")
</pallas_src>

<mosaic_0001>
module attributes {stable_mosaic.version = 11 : i64} {
  func.func @_proj_kernel(%arg0: i32, %arg1: memref<16x32xbf16, #tpu.memory_space<vmem>>, %arg2: memref<32x128xbf16, #tpu.memory_space<vmem>>, %arg3: memref<1x128xf32, #tpu.memory_space<vmem>>, %arg4: memref<16x128xbf16, #tpu.memory_space<vmem>>) attributes {dimension_semantics = [#tpu.dimension_semantics<parallel>], iteration_bounds = array<i64: 2>, scalar_prefetch = 0 : i64, scratch_operands = 0 : i64, tpu.core_type = #tpu.core_type<tc>, window_params = [{transform_indices = @transform_0, window_bounds = array<i64: 16, 32>}, {pipeline_mode = #tpu.pipeline_mode<synchronous>, transform_indices = @transform_1, window_bounds = array<i64: 32, 128>}, {pipeline_mode = #tpu.pipeline_mode<synchronous>, transform_indices = @transform_2, window_bounds = array<i64: 1, 128>}, {transform_indices = @transform_3, window_bounds = array<i64: 16, 128>}]} {
    %c0 = arith.constant 0 : index
    %c0_0 = arith.constant 0 : index
    %0 = vector.load %arg1[%c0, %c0_0] : memref<16x32xbf16, #tpu.memory_space<vmem>>, vector<16x32xbf16>
    %c0_1 = arith.constant 0 : index
    %c0_2 = arith.constant 0 : index
    %1 = vector.load %arg2[%c0_1, %c0_2] : memref<32x128xbf16, #tpu.memory_space<vmem>>, vector<32x128xbf16>
    %cst = arith.constant dense<0.000000e+00> : vector<16x128xf32>
    %2 = tpu.matmul %0, %1, %cst {dimension_numbers = #tpu.dot_dimension_numbers<[1], [0], [0], [1], [0, 0, 1, 1], [], []>} : vector<16x32xbf16>, vector<32x128xbf16>, vector<16x128xf32> -> vector<16x128xf32>
    %c0_3 = arith.constant 0 : index
    %c0_4 = arith.constant 0 : index
    %3 = vector.load %arg3[%c0_3, %c0_4] : memref<1x128xf32, #tpu.memory_space<vmem>>, vector<1x128xf32>
    %4 = vector.broadcast %3 : vector<1x128xf32> to vector<16x128xf32>
    %5 = arith.addf %2, %4 : vector<16x128xf32>
    %6 = arith.truncf %5 : vector<16x128xf32> to vector<16x128xbf16>
    %c0_5 = arith.constant 0 : index
    %c0_6 = arith.constant 0 : index
    %7 = vector.load %arg4[%c0_5, %c0_6] : memref<16x128xbf16, #tpu.memory_space<vmem>>, vector<16x128xbf16>
    tpu.vector_store %arg4[%c0_5, %c0_6], %6 {strides = array<i32>} : memref<16x128xbf16, #tpu.memory_space<vmem>>, vector<16x128xbf16>,
    return
  }
  func.func @transform_0(%arg0: i32) -> (i32, i32) {
    %c0_i32 = arith.constant 0 : i32
    %c0_i32_0 = arith.constant 0 : i32
    return %arg0, %c0_i32 : i32, i32
  }
  func.func @transform_1(%arg0: i32) -> (i32, i32) {
    %c0_i32 = arith.constant 0 : i32
    %c0_i32_0 = arith.constant 0 : i32
    %c0_i32_1 = arith.constant 0 : i32
    return %c0_i32, %c0_i32_0 : i32, i32
  }
  func.func @transform_2(%arg0: i32) -> (i32, i32) {
    %c0_i32 = arith.constant 0 : i32
    %c0_i32_0 = arith.constant 0 : i32
    %c0_i32_1 = arith.constant 0 : i32
    return %c0_i32, %c0_i32_0 : i32, i32
  }
  func.func @transform_3(%arg0: i32) -> (i32, i32) {
    %c0_i32 = arith.constant 0 : i32
    %c0_i32_0 = arith.constant 0 : i32
    return %arg0, %c0_i32 : i32, i32
  }
}

</mosaic_0001>

<llo_original>
// kernel: tpu_custom_call.1
$region0: #{tpu_custom_call.1}
  #allocation0 [shape = 'u32[]', space=smem, size = 0x4, offset = 0x4, fixed_abs, tag = 'smem constant byte address 0x4 - core index']
  #allocation1 [shape = 'u32[144,128]{1,0:T(1,128)}', space=vmem, size = 0x12000, scoped, tag = 'internal scratch']
  %s0 = inlined_call_operand.hbm [shape: bf16[32,32], index: 0, kind: input, shape index: {}]
  %s1 = inlined_call_operand.hbm [shape: bf16[32,128], index: 1, kind: input, shape index: {}]
  %s2 = inlined_call_operand.vmem [shape: f32[1,128], index: 2, kind: input, shape index: {}]
  %s3 = inlined_call_operand.hbm [shape: bf16[32,128], index: 3, kind: output, shape index: {}]
  %s4 = sld [smem:[#allocation0]]
  $region53: #{tpu_custom_call.1} parent=0
    _
  %s6 = ssub.s32 1, %s4
  %s7 = scalar_select 0, %s6, %s4
  $region1: #{tpu_custom_call.1} parent=0
    #allocation2 [shape = 'u8[8192]{0}', space=vmem, size = 0x2000, scoped, tag = 'input window, operand 0']
    #allocation3 [shape = 's32[2]{0}', space=sflag, size = 0x8, scoped, tag = 'scoped memory for tpu_custom_call.1']
    #allocation4 [shape = 's32[2]{0}', space=sflag, size = 0x8, scoped, tag = 'scoped memory for tpu_custom_call.1']
    #allocation5 [shape = 'u8[8192]{0}', space=vmem, size = 0x2000, scoped, tag = 'input window, operand 1, single buffered']
    #allocation6 [shape = 's32[1]{0}', space=sflag, size = 0x4, scoped, tag = 'scoped memory for tpu_custom_call.1']
    #allocation7 [shape = 'u8[8192]{0}', space=vmem, size = 0x2000, scoped, tag = 'output window, operand 0']
    %8 = vsyncpa [#allocation3], 0
    %s9 = scalar_lea.sflag [#allocation3], 1
    %10 = vsyncpa %s9, 0
    %11 = vsyncpa [#allocation6], 0
    %12 = vsyncpa [#allocation4], 0
    %s13 = scalar_lea.sflag [#allocation4], 1
    %14 = vsyncpa %s13, 0
    loop: start=0, step=1, limit=4
    $region2: #{tpu_custom_call.1} parent=1 // loop_pre_header
      _
    $region3: #{tpu_custom_call.1} parent=1 // loop_header
      %s16 = sphi 0, %s20
      %p17 = scmp.ge.s32.totalorder %s16, 4
      %s26 = sphi 0, %s28
      %s29 = sphi 0, %s26
      %s30 = sphi 0, %s29
      %s46 = sphi 0, %s30
      %s50 = sphi 0, %s50
      %s52 = sphi 0, %s50
      %s53 = sphi 0, %s52
      %s67 = sphi 0, %s53
      %s71 = sphi 0, %s71
      %s73 = sphi 0, %s71
      %s74 = sphi 0, %s73
      %s88 = sphi 0, %s74
      %s94 = sphi 0, %s96
      %s97 = sphi 0, %s94
      %s98 = sphi 0, %s97
      %s114 = sphi 0, %s98
    $region4: #{tpu_custom_call.1} parent=1 // loop_header_branch
      %19 = sbr.rel (%p17) target = $region8
    $region5: #{tpu_custom_call.1} parent=1 // loop_body
      %s21 = ssub.s32 %s16, 1
      %s22 = ssub.s32 %s16, 2
      %s23 = sadd.s32 %s16, 1
      %s24 = ssub.s32 %s16, %s23
      %p25 = scmp.eq.s32.totalorder %s24, 0
      %s27 = sadd.s32 %s26, 1
      %s28 = scalar_select %p25, %s26, %s27
      %p31 = pneg %p25
      %p32 = scmp.eq.s32.totalorder %s16, 1
      %p33 = por %p31, %p32
      %p34 = scmp.ne.s32.totalorder %s26, %s29
      %p35 = scmp.eq.s32.totalorder %s16, 0
      %p36 = por %p34, %p35
      %p37 = scmp.ne.s32.totalorder %s26, %s29
      %p38 = scmp.eq.s32.totalorder %s21, 1
      %p39 = por %p37, %p38
      %p40 = scmp.ne.s32.totalorder %s29, %s30
      %p41 = scmp.eq.s32.totalorder %s21, 0
      %p42 = por %p40, %p41
      %p43 = scmp.ne.s32.totalorder %s29, %s30
      %p44 = scmp.eq.s32.totalorder %s22, 1
      %p45 = por %p43, %p44
      %p47 = scmp.ne.s32.totalorder %s30, %s46
      %p48 = scmp.eq.s32.totalorder %s22, 0
      %p49 = por %p47, %p48
      %s51 = sadd.s32 %s50, 1
      %p54 = scmp.eq.s32.totalorder %s16, 1
      %p55 = scmp.ne.s32.totalorder %s50, %s52
      %p56 = scmp.eq.s32.totalorder %s16, 0
      %p57 = por %p55, %p56
      %p58 = scmp.ne.s32.totalorder %s50, %s52
      %p59 = scmp.eq.s32.totalorder %s21, 1
      %p60 = por %p58, %p59
      %p61 = scmp.ne.s32.totalorder %s52, %s53
      %p62 = scmp.eq.s32.totalorder %s21, 0
      %p63 = por %p61, %p62
      %p64 = scmp.ne.s32.totalorder %s52, %s53
      %p65 = scmp.eq.s32.totalorder %s22, 1
      %p66 = por %p64, %p65
      %p68 = scmp.ne.s32.totalorder %s53, %s67
      %p69 = scmp.eq.s32.totalorder %s22, 0
      %p70 = por %p68, %p69
      %s72 = sadd.s32 %s71, 1
      %p75 = scmp.eq.s32.totalorder %s16, 1
      %p76 = scmp.ne.s32.totalorder %s71, %s73
      %p77 = scmp.eq.s32.totalorder %s16, 0
      %p78 = por %p76, %p77
      %p79 = scmp.ne.s32.totalorder %s71, %s73
      %p80 = scmp.eq.s32.totalorder %s21, 1
      %p81 = por %p79, %p80
      %p82 = scmp.ne.s32.totalorder %s73, %s74
      %p83 = scmp.eq.s32.totalorder %s21, 0
      %p84 = por %p82, %p83
      %p85 = scmp.ne.s32.totalorder %s73, %s74
      %p86 = scmp.eq.s32.totalorder %s22, 1
      %p87 = por %p85, %p86
      %p89 = scmp.ne.s32.totalorder %s74, %s88
      %p90 = scmp.eq.s32.totalorder %s22, 0
      %p91 = por %p89, %p90
      %s92 = ssub.s32 %s16, %s23
      %p93 = scmp.eq.s32.totalorder %s92, 0
      %s95 = sadd.s32 %s94, 1
      %s96 = scalar_select %p93, %s94, %s95
      %p99 = pneg %p93
      %p100 = scmp.eq.s32.totalorder %s16, 1
      %p101 = por %p99, %p100
      %p102 = scmp.ne.s32.totalorder %s94, %s97
      %p103 = scmp.eq.s32.totalorder %s16, 0
      %p104 = por %p102, %p103
      %p105 = scmp.ne.s32.totalorder %s94, %s97
      %p106 = scmp.eq.s32.totalorder %s21, 1
      %p107 = por %p105, %p106
      %p108 = scmp.ne.s32.totalorder %s97, %s98
      %p109 = scmp.eq.s32.totalorder %s21, 0
      %p110 = por %p108, %p109
      %p111 = scmp.ne.s32.totalorder %s97, %s98
      %p112 = scmp.eq.s32.totalorder %s22, 1
      %p113 = por %p111, %p112
      %p115 = scmp.ne.s32.totalorder %s98, %s114
      %p116 = scmp.eq.s32.totalorder %s22, 0
      %p117 = por %p115, %p116
      %p118 = scmp.le.s32.totalorder 1, %s16
      %p119 = scmp.lt.s32.totalorder %s16, 3
      %p120 = pnand %p118, %p119
      %p121 = pneg %p120
      // Predicated region
      $region9: #{tpu_custom_call.1} parent=5 // pred_check
        _
      $region10: #{tpu_custom_call.1} parent=5 // pred_check_branch
        %123 = sbr.rel (%p120) target = $region12
      $region11: #{tpu_custom_call.1} parent=5 // pred_region
        %s124 = ssub.s32 %s16, 1
        // Predicated region
        $region13: #{tpu_custom_call.1} parent=11 // pred_check
          %p125 = pneg %p63
        $region14: #{tpu_custom_call.1} parent=11 // pred_check_branch
          %127 = sbr.rel (%p125) target = $region16
        $region15: #{tpu_custom_call.1} parent=11 // pred_region
          %s129 = ssub.s32 256, 256
          %130 = vsyncadd [#allocation6], %s129
          %s131 = sshll.u32 [#allocation5], 4
          %s132 = int_to_ptr.vmem [resolvable:$true] %s131
          %137 = dma.hbm_to_vmem [thread:$0]  %s1, 256, %s132, [#allocation6], 64, 64, 4
        $region16: #{tpu_custom_call.1} parent=11 // pred_fallthru
          _
        // Predicated region
        $region17: #{tpu_custom_call.1} parent=11 // pred_check
          %p138 = pneg %p84
        $region18: #{tpu_custom_call.1} parent=11 // pred_check_branch
          %140 = sbr.rel (%p138) target = $region20
        $region19: #{tpu_custom_call.1} parent=11 // pred_region
          _
        $region20: #{tpu_custom_call.1} parent=11 // pred_fallthru
          _
      $region12: #{tpu_custom_call.1} parent=5 // pred_fallthru
        _
      %p141 = scmp.lt.s32.totalorder %s16, 2
      // Predicated region
      $region21: #{tpu_custom_call.1} parent=5 // pred_check
        %p142 = pneg %p141
      $region22: #{tpu_custom_call.1} parent=5 // pred_check_branch
        %144 = sbr.rel (%p142) target = $region24
      $region23: #{tpu_custom_call.1} parent=5 // pred_region
        // Predicated region
        $region25: #{tpu_custom_call.1} parent=23 // pred_check
          %p145 = pneg %p36
        $region26: #{tpu_custom_call.1} parent=23 // pred_check_branch
          %147 = sbr.rel (%p145) target = $region28
        $region27: #{tpu_custom_call.1} parent=23 // pred_region
          %s148 = sand.u32 %s26, 1
          %s149 = scalar_lea.sflag [#allocation3], %s148
          %s150 = sand.u32 %s26, 1
          %s151 = smul.addr %s150, 8
          %s152 = scalar_lea.vmem [#allocation2], %s151
          %s153 = smul.u32 2, %s16
          %s155 = ssub.s32 128, 128
          %156 = vsyncadd %s149, %s155
          %s157 = smul.addr %s153, 64
          %s158 = scalar_lea.hbm %s0, %s157
          %s159 = sshll.u32 %s152, 4
          %s160 = int_to_ptr.vmem [resolvable:$true] %s159
          %165 = dma.hbm_to_vmem [thread:$0]  %s158, 128, %s160, %s149, 64, 64, 4
        $region28: #{tpu_custom_call.1} parent=23 // pred_fallthru
          _
      $region24: #{tpu_custom_call.1} parent=5 // pred_fallthru
        _
      %p166 = scmp.le.s32.totalorder 1, %s16
      %p167 = scmp.lt.s32.totalorder %s16, 3
      %p168 = pnand %p166, %p167
      %p169 = pneg %p168
      // Predicated region
      $region29: #{tpu_custom_call.1} parent=5 // pred_check
        _
      $region30: #{tpu_custom_call.1} parent=5 // pred_check_branch
        %171 = sbr.rel (%p168) target = $region32
      $region31: #{tpu_custom_call.1} parent=5 // pred_region
        %s172 = ssub.s32 %s16, 1
        %s173 = sand.u32 %s29, 1
        %s174 = scalar_lea.sflag [#allocation3], %s173
        %s175 = sand.u32 %s29, 1
        %s176 = smul.addr %s175, 8
        %s177 = scalar_lea.vmem [#allocation2], %s176
        // Predicated region
        $region33: #{tpu_custom_call.1} parent=31 // pred_check
          %p178 = pneg %p42
        $region34: #{tpu_custom_call.1} parent=31 // pred_check_branch
          %180 = sbr.rel (%p178) target = $region36
        $region35: #{tpu_custom_call.1} parent=31 // pred_region
          %181 = dma.done %s174, 128
        $region36: #{tpu_custom_call.1} parent=31 // pred_fallthru
          _
        // Predicated region
        $region37: #{tpu_custom_call.1} parent=31 // pred_check
          %p182 = pneg %p63
        $region38: #{tpu_custom_call.1} parent=31 // pred_check_branch
          %184 = sbr.rel (%p182) target = $region40
        $region39: #{tpu_custom_call.1} parent=31 // pred_region
          %185 = dma.done [#allocation6], 256
        $region40: #{tpu_custom_call.1} parent=31 // pred_fallthru
          _
        %s186 = sand.u32 %s29, 1
        %s187 = scalar_lea.sflag [#allocation3], %s186
        %s188 = sand.u32 %s29, 1
        %s189 = smul.addr %s188, 8
        %s190 = scalar_lea.vmem [#allocation2], %s189
        %p191 = pneg %p42
        %p192 = pneg %p39
        %p193 = pneg %p63
        %p194 = pneg %p60
        %p195 = pneg %p84
        %p196 = pneg %p81
        %p197 = pneg %p110
        %p198 = pneg %p107
        %s199 = sand.u32 %s97, 1
        %s200 = scalar_lea.sflag [#allocation4], %s199
        %s201 = sand.u32 %s97, 1
        %s202 = smul.addr %s201, 8
        %s203 = scalar_lea.vmem [#allocation7], %s202
        %s204 = smul.u32 2, %s21
        %s205 = smul.u32 2, %s21
        %v207 = vld [vmem:[%s177] sm:$0xf]
        %v208 = vld [vmem:[%s177 + $0x4] sm:$0xf]
        %v209 = vld [vmem:[#allocation5] sm:$0xf]
        %v210 = vld [vmem:[#allocation5 + $0x4] sm:$0xf]
        %v211 = vld [vmem:[#allocation5 + $0x8] sm:$0xf]
        %v212 = vld [vmem:[#allocation5 + $0xc] sm:$0xf]
        %v213 = vld [vmem:[%s2] sm:$0x1]
        %v215 = vlaneseq
        %v216 = vshrl.u32 %v215, 7
        %v217 = vsub.s32 0, %v216
        %v218 = vrot.slane %v213, %v217
        %v222 = vunpack.c.l.b16 %v207
        %v223 = vunpack.c.l.b16 %v208
        %v224 = vpack.c.b16 %v223, %v222
        %v229 = vunpack.c.l.b16 %v209
        %v230 = vunpack.c.l.b16 %v210
        %v231 = vunpack.c.l.b16 %v211
        %v232 = vunpack.c.l.b16 %v212
        %v233 = vpack.c.b16 %v230, %v229
        %v234 = vpack.c.b16 %v232, %v231
        %vm237 = vcmask 261120
        %v239 = vsel %vm237, %v224, 0
        %241 = vmatprep.subr.bf16.mxu0 0
        %242 = vmatpush1.bf16.msra.mxu0 %v233
        %243 = vmatprep.subr.bf16.mxu0 0
        %244 = vmatpush1.bf16.msra.mxu0 %v234
        %245 = vmatprep.subr.bf16.mxu0 0
        %246 = vmatpush1.bf16.msra.mxu0 0
        %247 = vmatprep.subr.bf16.mxu0 0
        %248 = vmatpush1.bf16.msra.mxu0 0
        %249 = vmatprep.subr.bf16.mxu0 0
        %250 = vmatpush1.bf16.msra.mxu0 0
        %251 = vmatprep.subr.bf16.mxu0 0
        %252 = vmatpush1.bf16.msra.mxu0 0
        %253 = vmatprep.subr.bf16.mxu0 0
        %254 = vmatpush1.bf16.msra.mxu0 0
        %255 = vmatprep.subr.bf16.mxu0 0
        %256 = vmatpush1.bf16.msra.mxu0 0
        %257 = vmatprep.subr.bf16.mxu0 0
        %258 = vmatpush1.bf16.msra.mxu0 0
        %259 = vmatprep.subr.bf16.mxu0 0
        %260 = vmatpush1.bf16.msra.mxu0 0
        %261 = vmatprep.subr.bf16.mxu0 0
        %262 = vmatpush1.bf16.msra.mxu0 0
        %263 = vmatprep.subr.bf16.mxu0 0
        %264 = vmatpush1.bf16.msra.mxu0 0
        %265 = vmatprep.subr.bf16.mxu0 0
        %266 = vmatpush1.bf16.msra.mxu0 0
        %267 = vmatprep.subr.bf16.mxu0 0
        %268 = vmatpush1.bf16.msra.mxu0 0
        %269 = vmatprep.subr.bf16.mxu0 0
        %270 = vmatpush1.bf16.msra.mxu0 0
        %271 = vmatprep.subr.bf16.mxu0 0
        %272 = vmatpush1.bf16.msra.mxu0 0
        %273 = vmatprep.mubr.bf16.mxu0 0
        %274 = vmatmul.mubr.bf16.gmra.mrb[0].mxu0 %v239
        %v275 = vpop.f32.mrb[0].mxu0
        %v276 = vadd.f32 %v218, %v275
        %v277 = vpop.f32.mrb[0].mxu0
        %v278 = vpop.f32.mrb[0].mxu0
        %v279 = vadd.f32 %v218, %v278
        %v280 = vpop.f32.mrb[0].mxu0
        %281 = vdwg.mxu0
        %v282 = vpack.c.bf16 %v279, %v276
        %v284 = vunpack.c.l.b16 %v282
        %v285 = vunpack.c.h.b16 %v282
        %v286 = vpack.c.b16 %v284, %v284
        %v287 = vpack.c.b16 %v285, %v285
        %290 = vst [vmem:[%s203] sm:$0xf] %v286
        %291 = vst [vmem:[%s203 + $0x4] sm:$0xf] %v287
        %s292 = sand.u32 %s97, 1
        %s293 = scalar_lea.sflag [#allocation4], %s292
        %s294 = sand.u32 %s97, 1
        %s295 = smul.addr %s294, 8
        %s296 = scalar_lea.vmem [#allocation7], %s295
        // Predicated region
        $region41: #{tpu_custom_call.1} parent=31 // pred_check
          %p297 = pneg %p107
        $region42: #{tpu_custom_call.1} parent=31 // pred_check_branch
          %299 = sbr.rel (%p297) target = $region44
        $region43: #{tpu_custom_call.1} parent=31 // pred_region
          %s300 = smul.u32 2, %s21
          %s302 = ssub.s32 128, 128
          %303 = vsyncadd %s293, %s302
          %s304 = smul.addr %s300, 64
          %s305 = scalar_lea.hbm %s3, %s304
          %s306 = sshll.u32 %s296, 4
          %s307 = int_to_ptr.vmem [resolvable:$true] %s306
          %312 = dma.vmem_to_hbm [thread:$0]  %s307, 128, %s305, %s293, 64, 64, 4
        $region44: #{tpu_custom_call.1} parent=31 // pred_fallthru
          _
      $region32: #{tpu_custom_call.1} parent=5 // pred_fallthru
        _
      %p313 = scmp.le.s32.totalorder 2, %s16
      // Predicated region
      $region45: #{tpu_custom_call.1} parent=5 // pred_check
        %p314 = pneg %p313
      $region46: #{tpu_custom_call.1} parent=5 // pred_check_branch
        %316 = sbr.rel (%p314) target = $region48
      $region47: #{tpu_custom_call.1} parent=5 // pred_region
        %s317 = ssub.s32 %s16, 2
        // Predicated region
        $region49: #{tpu_custom_call.1} parent=47 // pred_check
          %p318 = pneg %p113
        $region50: #{tpu_custom_call.1} parent=47 // pred_check_branch
          %320 = sbr.rel (%p318) target = $region52
        $region51: #{tpu_custom_call.1} parent=47 // pred_region
          %s321 = sand.u32 %s98, 1
          %s322 = scalar_lea.sflag [#allocation4], %s321
          %s323 = sand.u32 %s98, 1
          %s324 = smul.addr %s323, 8
          %s325 = scalar_lea.vmem [#allocation7], %s324
          %326 = dma.done %s322, 128
        $region52: #{tpu_custom_call.1} parent=47 // pred_fallthru
          _
      $region48: #{tpu_custom_call.1} parent=5 // pred_fallthru
        _
    $region6: #{tpu_custom_call.1} parent=1 // loop_footer
      %s20 = sadd.s32 1, %s16
    $region7: #{tpu_custom_call.1} parent=1 // loop_footer_branch
      %15 = sbr.rel target = $region3
    $region8: #{tpu_custom_call.1} parent=1 // loop_exit
      _
    %327 = vsyncpa [#allocation3], 1
    %s328 = scalar_lea.sflag [#allocation3], 1
    %329 = vsyncpa %s328, 1
    %330 = vsyncpa [#allocation6], 1
    %331 = vsyncpa [#allocation4], 1
    %s332 = scalar_lea.sflag [#allocation4], 1
    %333 = vsyncpa %s332, 1

</llo_original>
